<compile_context>
chip_gen: v7x
topology: tpu7x:2x2x1
jax: 0.10.0
libtpu: 0.0.40
codegen_flags: <defaults>
</compile_context>

<pallas_src>
import jax
import jax.numpy as jnp
from jax import lax
from jax.experimental import pallas as pl
from jax.experimental.pallas import tpu as pltpu

INPUT_DIM = 15
HIDDEN_DIM = 64
OUTPUT_DIM = 1


def _rnn_fc_kernel(x_ref,        # (Bt, S, I)  input tile, f32, batch-first
                   w_ih_t_ref,   # (I, H)      rnn weight_ih_l0^T, bf16
                   w_hh_t_ref,   # (H, H)      rnn weight_hh_l0^T, bf16
                   b_ref,        # (1, H)      b_ih + b_hh, f32
                   w_fc_ref,     # (O, H)      fc weight (torch layout), f32
                   b_fc_ref,     # (1, 1)      fc bias, SMEM scalar (O == 1)
                   out_ref,      # (1, O, Bt)  lane-dense output row
                   xp_ref):      # (Bt, S, H)  VMEM scratch: x @ W_ih^T + b
    Bt, S, I = x_ref.shape
    H = w_hh_t_ref.shape[0]
    O = w_fc_ref.shape[0]

    # ---- Prologue: input projection for ALL timesteps, one bf16 MXU pass. ----
    # (Bt, S, I) -> (Bt*S, I) is layout-trivial because S == 8 fills sublanes.
    x2 = x_ref[...].reshape(Bt * S, I).astype(jnp.bfloat16)
    xp = jnp.dot(x2, w_ih_t_ref[...],
                 preferred_element_type=jnp.float32) + b_ref[...]
    # Park the projections in VMEM scratch instead of 8 live vreg values so big
    # batch tiles don't spill; per-step loads hide under the MXU/tanh chain.
    xp_ref[...] = xp.reshape(Bt, S, H)

    # ---- Recurrence: statically unrolled, bf16-resident h, 1 MXU matmul/step.
    w_hh_t = w_hh_t_ref[...]                          # (H, H) bf16, loaded once
    pre = xp_ref[:, 0, :]                             # h0 == 0 -> skip first matmul
    h_f = jnp.tanh(pre)                               # f32 (feeds the head at t=S-1)
    h_bf = h_f.astype(jnp.bfloat16)                   # bf16 operand for next step
    for t in range(1, S):
        pre = xp_ref[:, t, :] + jnp.dot(h_bf, w_hh_t,
                                        preferred_element_type=jnp.float32)
        h_f = jnp.tanh(pre)
        h_bf = h_f.astype(jnp.bfloat16)

    # ---- FC head on the last hidden state, emitted lane-dense (batch on lanes).
    # (O, H) . (Bt, H)^T -> (O, Bt): one small MXU pass, lane-dense writeback.
    y = lax.dot_general(w_fc_ref[...], h_f, (((1,), (1,)), ((), ())),
                        preferred_element_type=jnp.float32)
    y = y + b_fc_ref[0, 0]                            # scalar bias from SMEM (O == 1)
    out_ref[...] = y.reshape(1, O, Bt)


@jax.jit
def pred_model_forward(x_bsi, params):
    """x_bsi: (batch, seq, input_dim) float32, like PyTorch batch_first RNN."""
    w_ih, w_hh, b_ih, b_hh, w_fc, b_fc = params
    B, S, I = x_bsi.shape
    H = w_hh.shape[0]
    O = w_fc.shape[0]

    # One-time parameter prep (tiny ops, outside the kernel).
    w_ih_t = w_ih.T.astype(jnp.bfloat16)               # (I, H) bf16 MXU operand
    w_hh_t = w_hh.T.astype(jnp.bfloat16)               # (H, H) bf16 MXU operand
    b_rnn = (b_ih + b_hh).reshape(1, H).astype(jnp.float32)
    w_fc2 = w_fc.astype(jnp.float32)                   # (O, H) torch layout
    b_fc2 = b_fc.reshape(1, O).astype(jnp.float32)     # SMEM scalar (O == 1)

    # Batch tiling: one tile in the small-batch latency regime; otherwise at
    # least 2 tiles (so both v7x TensorCores get work) of <= 1024 rows each,
    # rounded up to a multiple of 8 sublanes.
    if B <= 256:
        bt = B
    else:
        n_tiles = max(2, -(-B // 1024))
        bt = ((-(-B // n_tiles)) + 7) // 8 * 8
    num_tiles = pl.cdiv(B, bt)

    out3 = pl.pallas_call(
        _rnn_fc_kernel,
        out_shape=jax.ShapeDtypeStruct((num_tiles, O, bt), jnp.float32),
        grid_spec=pltpu.PrefetchScalarGridSpec(
            num_scalar_prefetch=0,
            grid=(num_tiles,),
            in_specs=[
                pl.BlockSpec((bt, S, I), lambda i: (i, 0, 0)),
                pl.BlockSpec((I, H), lambda i: (0, 0)),
                pl.BlockSpec((H, H), lambda i: (0, 0)),
                pl.BlockSpec((1, H), lambda i: (0, 0)),
                pl.BlockSpec((O, H), lambda i: (0, 0)),
                pl.BlockSpec(memory_space=pltpu.MemorySpace.SMEM),
            ],
            out_specs=pl.BlockSpec((1, O, bt), lambda i: (i, 0, 0)),
            scratch_shapes=[pltpu.VMEM((bt, S, H), jnp.float32)],
        ),
        compiler_params=pltpu.CompilerParams(
            dimension_semantics=("parallel",)),
    )(x_bsi, w_ih_t, w_hh_t, b_rnn, w_fc2, b_fc2)

    # (num_tiles, O, bt) lane-dense tiles -> (B, O); last tile may be padded.
    out = jnp.transpose(out3, (0, 2, 1)).reshape(num_tiles * bt, O)[:B]
    return out


def init_params(key, input_dim=INPUT_DIM, hidden_dim=HIDDEN_DIM,
                output_dim=OUTPUT_DIM):
    """Deterministic params, same shapes/init-range as torch nn.RNN / nn.Linear."""
    k = jax.random.split(key, 6)
    bound = 1.0 / jnp.sqrt(hidden_dim)
    w_ih = jax.random.uniform(k[0], (hidden_dim, input_dim), jnp.float32,
                              -bound, bound)
    w_hh = jax.random.uniform(k[1], (hidden_dim, hidden_dim), jnp.float32,
                              -bound, bound)
    b_ih = jax.random.uniform(k[2], (hidden_dim,), jnp.float32, -bound, bound)
    b_hh = jax.random.uniform(k[3], (hidden_dim,), jnp.float32, -bound, bound)
    w_fc = jax.random.uniform(k[4], (output_dim, hidden_dim), jnp.float32,
                              -bound, bound)
    b_fc = jax.random.uniform(k[5], (output_dim,), jnp.float32, -bound, bound)
    return (w_ih, w_hh, b_ih, b_hh, w_fc, b_fc)


def reference_forward(x_bsi, params):
    """Pure-JAX f32 reference matching torch semantics (tanh RNN, last step, fc)."""
    w_ih, w_hh, b_ih, b_hh, w_fc, b_fc = params
    B, S, _ = x_bsi.shape
    H = w_hh.shape[0]
    h = jnp.zeros((B, H), jnp.float32)
    for t in range(S):
        h = jnp.tanh(x_bsi[:, t, :] @ w_ih.T + b_ih + h @ w_hh.T + b_hh)
    return h @ w_fc.T + b_fc


if __name__ == "__main__":
    key = jax.random.PRNGKey(0)
    k_x, k_p = jax.random.split(key)

    batch, seq = 2, 8
    x = jax.random.normal(k_x, (batch, seq, INPUT_DIM), jnp.float32)
    params = init_params(k_p)

    out = jax.block_until_ready(pred_model_forward(x, params))
    ref = reference_forward(x, params)

    assert out.shape == (batch, OUTPUT_DIM), out.shape
    # Both matmuls use bf16 operands (f32 accumulation) and h is bf16-resident
    # across the 8 recurrent steps, so compare against the f32 reference with a
    # correspondingly loosened tolerance.
    assert jnp.allclose(out, ref, atol=5e-2, rtol=5e-2), (out, ref)

    print("KERNEL_OK")
</pallas_src>

<mosaic_0001>
module attributes {stable_mosaic.version = 11 : i64} {
  func.func @_rnn_fc_kernel(%arg0: i32, %arg1: memref<2x8x15xf32, #tpu.memory_space<vmem>>, %arg2: memref<15x64xbf16, #tpu.memory_space<vmem>>, %arg3: memref<64x64xbf16, #tpu.memory_space<vmem>>, %arg4: memref<1x64xf32, #tpu.memory_space<vmem>>, %arg5: memref<1x64xf32, #tpu.memory_space<vmem>>, %arg6: memref<1x1xf32, #tpu.memory_space<smem>>, %arg7: memref<1x1x2xf32, #tpu.memory_space<vmem>>, %arg8: memref<2x8x64xf32, #tpu.memory_space<vmem>>) attributes {dimension_semantics = [#tpu.dimension_semantics<parallel>], iteration_bounds = array<i64: 1>, scalar_prefetch = 0 : i64, scratch_operands = 1 : i64, tpu.core_type = #tpu.core_type<tc>, window_params = [{transform_indices = @transform_0, window_bounds = array<i64: 2, 8, 15>}, {pipeline_mode = #tpu.pipeline_mode<synchronous>, transform_indices = @transform_1, window_bounds = array<i64: 15, 64>}, {pipeline_mode = #tpu.pipeline_mode<synchronous>, transform_indices = @transform_2, window_bounds = array<i64: 64, 64>}, {pipeline_mode = #tpu.pipeline_mode<synchronous>, transform_indices = @transform_3, window_bounds = array<i64: 1, 64>}, {pipeline_mode = #tpu.pipeline_mode<synchronous>, transform_indices = @transform_4, window_bounds = array<i64: 1, 64>}, {transform_indices = @transform_5, window_bounds = array<i64: 1, 1>}, {transform_indices = @transform_6, window_bounds = array<i64: 1, 1, 2>}]} {
    %c0 = arith.constant 0 : index
    %c0_0 = arith.constant 0 : index
    %c0_1 = arith.constant 0 : index
    %0 = vector.load %arg1[%c0, %c0_0, %c0_1] : memref<2x8x15xf32, #tpu.memory_space<vmem>>, vector<2x8x15xf32>
    %1 = vector.shape_cast %0 : vector<2x8x15xf32> to vector<16x15xf32>
    %2 = arith.truncf %1 : vector<16x15xf32> to vector<16x15xbf16>
    %c0_2 = arith.constant 0 : index
    %c0_3 = arith.constant 0 : index
    %3 = vector.load %arg2[%c0_2, %c0_3] : memref<15x64xbf16, #tpu.memory_space<vmem>>, vector<15x64xbf16>
    %cst = arith.constant dense<0.000000e+00> : vector<16x64xf32>
    %4 = tpu.matmul %2, %3, %cst {dimension_numbers = #tpu.dot_dimension_numbers<[1], [0], [0], [1], [0, 0, 1, 1], [], []>} : vector<16x15xbf16>, vector<15x64xbf16>, vector<16x64xf32> -> vector<16x64xf32>
    %c0_4 = arith.constant 0 : index
    %c0_5 = arith.constant 0 : index
    %5 = vector.load %arg4[%c0_4, %c0_5] : memref<1x64xf32, #tpu.memory_space<vmem>>, vector<1x64xf32>
    %6 = vector.broadcast %5 : vector<1x64xf32> to vector<16x64xf32>
    %7 = arith.addf %4, %6 : vector<16x64xf32>
    %8 = vector.shape_cast %7 : vector<16x64xf32> to vector<2x8x64xf32>
    %c0_6 = arith.constant 0 : index
    %c0_7 = arith.constant 0 : index
    %c0_8 = arith.constant 0 : index
    %9 = vector.load %arg8[%c0_6, %c0_7, %c0_8] : memref<2x8x64xf32, #tpu.memory_space<vmem>>, vector<2x8x64xf32>
    tpu.vector_store %arg8[%c0_6, %c0_7, %c0_8], %8 {strides = array<i32>} : memref<2x8x64xf32, #tpu.memory_space<vmem>>, vector<2x8x64xf32>,
    %c0_9 = arith.constant 0 : index
    %c0_10 = arith.constant 0 : index
    %10 = vector.load %arg3[%c0_9, %c0_10] : memref<64x64xbf16, #tpu.memory_space<vmem>>, vector<64x64xbf16>
    %c0_11 = arith.constant 0 : index
    %c0_12 = arith.constant 0 : index
    %c0_13 = arith.constant 0 : index
    %11 = vector.load %arg8[%c0_11, %c0_12, %c0_13] : memref<2x8x64xf32, #tpu.memory_space<vmem>>, vector<2x1x64xf32>
    %12 = vector.shape_cast %11 : vector<2x1x64xf32> to vector<2x64xf32>
    %13 = math.tanh %12 : vector<2x64xf32>
    %14 = arith.truncf %13 : vector<2x64xf32> to vector<2x64xbf16>
    %c0_14 = arith.constant 0 : index
    %c1 = arith.constant 1 : index
    %c0_15 = arith.constant 0 : index
    %15 = vector.load %arg8[%c0_14, %c1, %c0_15] : memref<2x8x64xf32, #tpu.memory_space<vmem>>, vector<2x1x64xf32>
    %16 = vector.shape_cast %15 : vector<2x1x64xf32> to vector<2x64xf32>
    %cst_16 = arith.constant dense<0.000000e+00> : vector<2x64xf32>
    %17 = tpu.matmul %14, %10, %cst_16 {dimension_numbers = #tpu.dot_dimension_numbers<[1], [0], [0], [1], [0, 0, 1, 1], [], []>} : vector<2x64xbf16>, vector<64x64xbf16>, vector<2x64xf32> -> vector<2x64xf32>
    %18 = arith.addf %16, %17 : vector<2x64xf32>
    %19 = math.tanh %18 : vector<2x64xf32>
    %20 = arith.truncf %19 : vector<2x64xf32> to vector<2x64xbf16>
    %c0_17 = arith.constant 0 : index
    %c2 = arith.constant 2 : index
    %c0_18 = arith.constant 0 : index
    %21 = vector.load %arg8[%c0_17, %c2, %c0_18] : memref<2x8x64xf32, #tpu.memory_space<vmem>>, vector<2x1x64xf32>
    %22 = vector.shape_cast %21 : vector<2x1x64xf32> to vector<2x64xf32>
    %cst_19 = arith.constant dense<0.000000e+00> : vector<2x64xf32>
    %23 = tpu.matmul %20, %10, %cst_19 {dimension_numbers = #tpu.dot_dimension_numbers<[1], [0], [0], [1], [0, 0, 1, 1], [], []>} : vector<2x64xbf16>, vector<64x64xbf16>, vector<2x64xf32> -> vector<2x64xf32>
    %24 = arith.addf %22, %23 : vector<2x64xf32>
    %25 = math.tanh %24 : vector<2x64xf32>
    %26 = arith.truncf %25 : vector<2x64xf32> to vector<2x64xbf16>
    %c0_20 = arith.constant 0 : index
    %c3 = arith.constant 3 : index
    %c0_21 = arith.constant 0 : index
    %27 = vector.load %arg8[%c0_20, %c3, %c0_21] : memref<2x8x64xf32, #tpu.memory_space<vmem>>, vector<2x1x64xf32>
    %28 = vector.shape_cast %27 : vector<2x1x64xf32> to vector<2x64xf32>
    %cst_22 = arith.constant dense<0.000000e+00> : vector<2x64xf32>
    %29 = tpu.matmul %26, %10, %cst_22 {dimension_numbers = #tpu.dot_dimension_numbers<[1], [0], [0], [1], [0, 0, 1, 1], [], []>} : vector<2x64xbf16>, vector<64x64xbf16>, vector<2x64xf32> -> vector<2x64xf32>
    %30 = arith.addf %28, %29 : vector<2x64xf32>
    %31 = math.tanh %30 : vector<2x64xf32>
    %32 = arith.truncf %31 : vector<2x64xf32> to vector<2x64xbf16>
    %c0_23 = arith.constant 0 : index
    %c4 = arith.constant 4 : index
    %c0_24 = arith.constant 0 : index
    %33 = vector.load %arg8[%c0_23, %c4, %c0_24] : memref<2x8x64xf32, #tpu.memory_space<vmem>>, vector<2x1x64xf32>
    %34 = vector.shape_cast %33 : vector<2x1x64xf32> to vector<2x64xf32>
    %cst_25 = arith.constant dense<0.000000e+00> : vector<2x64xf32>
    %35 = tpu.matmul %32, %10, %cst_25 {dimension_numbers = #tpu.dot_dimension_numbers<[1], [0], [0], [1], [0, 0, 1, 1], [], []>} : vector<2x64xbf16>, vector<64x64xbf16>, vector<2x64xf32> -> vector<2x64xf32>
    %36 = arith.addf %34, %35 : vector<2x64xf32>
    %37 = math.tanh %36 : vector<2x64xf32>
    %38 = arith.truncf %37 : vector<2x64xf32> to vector<2x64xbf16>
    %c0_26 = arith.constant 0 : index
    %c5 = arith.constant 5 : index
    %c0_27 = arith.constant 0 : index
    %39 = vector.load %arg8[%c0_26, %c5, %c0_27] : memref<2x8x64xf32, #tpu.memory_space<vmem>>, vector<2x1x64xf32>
    %40 = vector.shape_cast %39 : vector<2x1x64xf32> to vector<2x64xf32>
    %cst_28 = arith.constant dense<0.000000e+00> : vector<2x64xf32>
    %41 = tpu.matmul %38, %10, %cst_28 {dimension_numbers = #tpu.dot_dimension_numbers<[1], [0], [0], [1], [0, 0, 1, 1], [], []>} : vector<2x64xbf16>, vector<64x64xbf16>, vector<2x64xf32> -> vector<2x64xf32>
    %42 = arith.addf %40, %41 : vector<2x64xf32>
    %43 = math.tanh %42 : vector<2x64xf32>
    %44 = arith.truncf %43 : vector<2x64xf32> to vector<2x64xbf16>
    %c0_29 = arith.constant 0 : index
    %c6 = arith.constant 6 : index
    %c0_30 = arith.constant 0 : index
    %45 = vector.load %arg8[%c0_29, %c6, %c0_30] : memref<2x8x64xf32, #tpu.memory_space<vmem>>, vector<2x1x64xf32>
    %46 = vector.shape_cast %45 : vector<2x1x64xf32> to vector<2x64xf32>
    %cst_31 = arith.constant dense<0.000000e+00> : vector<2x64xf32>
    %47 = tpu.matmul %44, %10, %cst_31 {dimension_numbers = #tpu.dot_dimension_numbers<[1], [0], [0], [1], [0, 0, 1, 1], [], []>} : vector<2x64xbf16>, vector<64x64xbf16>, vector<2x64xf32> -> vector<2x64xf32>
    %48 = arith.addf %46, %47 : vector<2x64xf32>
    %49 = math.tanh %48 : vector<2x64xf32>
    %50 = arith.truncf %49 : vector<2x64xf32> to vector<2x64xbf16>
    %c0_32 = arith.constant 0 : index
    %c7 = arith.constant 7 : index
    %c0_33 = arith.constant 0 : index
    %51 = vector.load %arg8[%c0_32, %c7, %c0_33] : memref<2x8x64xf32, #tpu.memory_space<vmem>>, vector<2x1x64xf32>
    %52 = vector.shape_cast %51 : vector<2x1x64xf32> to vector<2x64xf32>
    %cst_34 = arith.constant dense<0.000000e+00> : vector<2x64xf32>
    %53 = tpu.matmul %50, %10, %cst_34 {dimension_numbers = #tpu.dot_dimension_numbers<[1], [0], [0], [1], [0, 0, 1, 1], [], []>} : vector<2x64xbf16>, vector<64x64xbf16>, vector<2x64xf32> -> vector<2x64xf32>
    %54 = arith.addf %52, %53 : vector<2x64xf32>
    %55 = math.tanh %54 : vector<2x64xf32>
    %c0_35 = arith.constant 0 : index
    %c0_36 = arith.constant 0 : index
    %56 = vector.load %arg5[%c0_35, %c0_36] : memref<1x64xf32, #tpu.memory_space<vmem>>, vector<1x64xf32>
    %cst_37 = arith.constant dense<0.000000e+00> : vector<1x2xf32>
    %57 = tpu.matmul %56, %55, %cst_37 {dimension_numbers = #tpu.dot_dimension_numbers<[1], [1], [0], [0], [0, 0, 1, 0], [], []>} : vector<1x64xf32>, vector<2x64xf32>, vector<1x2xf32> -> vector<1x2xf32>
    %c0_38 = arith.constant 0 : index
    %c0_39 = arith.constant 0 : index
    %58 = memref.load %arg6[%c0_38, %c0_39] : memref<1x1xf32, #tpu.memory_space<smem>>
    %59 = vector.broadcast %58 : f32 to vector<1x2xf32>
    %60 = arith.addf %57, %59 : vector<1x2xf32>
    %61 = vector.shape_cast %60 : vector<1x2xf32> to vector<1x1x2xf32>
    %c0_40 = arith.constant 0 : index
    %c0_41 = arith.constant 0 : index
    %c0_42 = arith.constant 0 : index
    %62 = vector.load %arg7[%c0_40, %c0_41, %c0_42] : memref<1x1x2xf32, #tpu.memory_space<vmem>>, vector<1x1x2xf32>
    tpu.vector_store %arg7[%c0_40, %c0_41, %c0_42], %61 {strides = array<i32>} : memref<1x1x2xf32, #tpu.memory_space<vmem>>, vector<1x1x2xf32>,
    return
  }
  func.func @transform_0(%arg0: i32) -> (i32, i32, i32) {
    %c0_i32 = arith.constant 0 : i32
    %c0_i32_0 = arith.constant 0 : i32
    %c0_i32_1 = arith.constant 0 : i32
    return %arg0, %c0_i32, %c0_i32_0 : i32, i32, i32
  }
  func.func @transform_1(%arg0: i32) -> (i32, i32) {
    %c0_i32 = arith.constant 0 : i32
    %c0_i32_0 = arith.constant 0 : i32
    %c0_i32_1 = arith.constant 0 : i32
    return %c0_i32, %c0_i32_0 : i32, i32
  }
  func.func @transform_2(%arg0: i32) -> (i32, i32) {
    %c0_i32 = arith.constant 0 : i32
    %c0_i32_0 = arith.constant 0 : i32
    %c0_i32_1 = arith.constant 0 : i32
    return %c0_i32, %c0_i32_0 : i32, i32
  }
  func.func @transform_3(%arg0: i32) -> (i32, i32) {
    %c0_i32 = arith.constant 0 : i32
    %c0_i32_0 = arith.constant 0 : i32
    %c0_i32_1 = arith.constant 0 : i32
    return %c0_i32, %c0_i32_0 : i32, i32
  }
  func.func @transform_4(%arg0: i32) -> (i32, i32) {
    %c0_i32 = arith.constant 0 : i32
    %c0_i32_0 = arith.constant 0 : i32
    %c0_i32_1 = arith.constant 0 : i32
    return %c0_i32, %c0_i32_0 : i32, i32
  }
  func.func @transform_5(%arg0: i32) -> (i32, i32) {
    %c0_i32 = arith.constant 0 : i32
    %c0_i32_0 = arith.constant 0 : i32
    %c0_i32_1 = arith.constant 0 : i32
    return %c0_i32, %c0_i32_0 : i32, i32
  }
  func.func @transform_6(%arg0: i32) -> (i32, i32, i32) {
    %c0_i32 = arith.constant 0 : i32
    %c0_i32_0 = arith.constant 0 : i32
    %c0_i32_1 = arith.constant 0 : i32
    return %arg0, %c0_i32, %c0_i32_0 : i32, i32, i32
  }
}

</mosaic_0001>

<llo_original>
// kernel: pred_model_forward.1
$region0: #{pred_model_forward.1}
  #allocation0 [shape = 'u32[]', space=smem, size = 0x4, offset = 0x4, fixed_abs, tag = 'smem constant byte address 0x4 - core index']
  #allocation1 [shape = 'u32[144,128]{1,0:T(1,128)}', space=vmem, size = 0x12000, scoped, tag = 'internal scratch']
  #allocation2 [shape = 'f32[2,8,64]{2,1,0:T(8,128)}', space=vmem, size = 0x2000, scoped, tag = 'scratch operand']
  #allocation3 [shape = 'f32[1,1]{1,0:T(1,128)S(6)}', space=smem, size = 0x200, scoped, tag = 'scoped memory for pred_model_forward.1']
  %s0 = inlined_call_operand.vmem [shape: f32[2,8,15], index: 0, kind: input, shape index: {}]
  %s1 = inlined_call_operand.vmem [shape: bf16[15,64], index: 1, kind: input, shape index: {}]
  %s2 = inlined_call_operand.vmem [shape: bf16[64,64], index: 2, kind: input, shape index: {}]
  %s3 = inlined_call_operand.vmem [shape: f32[1,64], index: 3, kind: input, shape index: {}]
  %s4 = inlined_call_operand.vmem [shape: f32[1,64], index: 4, kind: input, shape index: {}]
  %s5 = inlined_call_operand.<no memory space> [shape: f32[1,1], index: 5, kind: input, shape index: {}]
  %s6 = inlined_call_operand.hbm [shape: f32[1,1,2], index: 6, kind: output, shape index: {}]
  %s7 = sld [smem:[#allocation0]]
  $region34: #{pred_model_forward.1} parent=0
    _
  %s9 = ssub.s32 1, %s7
  %s10 = scalar_select 0, %s9, %s7
  %11 = sst [smem:[#allocation3]] %s5
  $region1: #{pred_model_forward.1} parent=0
    #allocation4 [shape = 'u8[512]{0}', space=vmem, size = 0x400, scoped, tag = 'output window, operand 0, single buffered']
    #allocation5 [shape = 's32[1]{0}', space=sflag, size = 0x4, scoped, tag = 'scoped memory for pred_model_forward.1']
    %12 = vsyncpa [#allocation5], 0
    // Predicated region
    $region2: #{pred_model_forward.1} parent=1 // pred_check
      _
    $region3: #{pred_model_forward.1} parent=1 // pred_check_branch
      %14 = sbr.rel (0) target = $region5
    $region4: #{pred_model_forward.1} parent=1 // pred_region
      _
    $region5: #{pred_model_forward.1} parent=1 // pred_fallthru
      _
    // Predicated region
    $region6: #{pred_model_forward.1} parent=1 // pred_check
      _
    $region7: #{pred_model_forward.1} parent=1 // pred_check_branch
      %16 = sbr.rel (0) target = $region9
    $region8: #{pred_model_forward.1} parent=1 // pred_region
      _
    $region9: #{pred_model_forward.1} parent=1 // pred_fallthru
      _
    // Predicated region
    $region10: #{pred_model_forward.1} parent=1 // pred_check
      _
    $region11: #{pred_model_forward.1} parent=1 // pred_check_branch
      %18 = sbr.rel (0) target = $region13
    $region12: #{pred_model_forward.1} parent=1 // pred_region
      _
    $region13: #{pred_model_forward.1} parent=1 // pred_fallthru
      _
    // Predicated region
    $region14: #{pred_model_forward.1} parent=1 // pred_check
      _
    $region15: #{pred_model_forward.1} parent=1 // pred_check_branch
      %20 = sbr.rel (0) target = $region17
    $region16: #{pred_model_forward.1} parent=1 // pred_region
      _
    $region17: #{pred_model_forward.1} parent=1 // pred_fallthru
      _
    // Predicated region
    $region18: #{pred_model_forward.1} parent=1 // pred_check
      _
    $region19: #{pred_model_forward.1} parent=1 // pred_check_branch
      %22 = sbr.rel (0) target = $region21
    $region20: #{pred_model_forward.1} parent=1 // pred_region
      _
    $region21: #{pred_model_forward.1} parent=1 // pred_fallthru
      _
    // Predicated region
    $region22: #{pred_model_forward.1} parent=1 // pred_check
      _
    $region23: #{pred_model_forward.1} parent=1 // pred_check_branch
      %24 = sbr.rel (0) target = $region25
    $region24: #{pred_model_forward.1} parent=1 // pred_region
      _
    $region25: #{pred_model_forward.1} parent=1 // pred_fallthru
      _
    %v26 = vld [vmem:[%s0] sm:$0xff]
    %v27 = vld [vmem:[%s0 + $0x8] sm:$0xff]
    %v28 = vpack.c.bf16 %v27, %v26
    %v29 = vld [vmem:[%s1] sm:$0xf]
    %v30 = vld [vmem:[%s1 + $0x4] sm:$0xf]
    %v31 = vld [vmem:[%s3] sm:$0x1]
    %v33 = vlaneseq
    %v34 = vshrl.u32 %v33, 7
    %v35 = vsub.s32 0, %v34
    %v36 = vrot.slane %v31, %v35
    %v40 = vunpack.c.l.b16 %v29
    %v41 = vunpack.c.l.b16 %v30
    %v42 = vpack.c.b16 %v41, %v40
    %vm43 = vcmask 121856
    %v45 = vsel %vm43, %v28, 0
    %vm47 = vcmask 1046528
    %vm48 = vcmask 1047552
    %v49 = vsel %vm47, 4294967295, 65535
    %v50 = vsel %vm48, %v49, 0
    %v52 = vand.u32 %v42, %v50
    %54 = vmatprep.subr.bf16.mxu0 0
    %55 = vmatpush1.bf16.msra.mxu0 %v52
    %56 = vmatprep.subr.bf16.mxu0 0
    %57 = vmatpush1.bf16.msra.mxu0 0
    %58 = vmatprep.subr.bf16.mxu0 0
    %59 = vmatpush1.bf16.msra.mxu0 0
    %60 = vmatprep.subr.bf16.mxu0 0
    %61 = vmatpush1.bf16.msra.mxu0 0
    %62 = vmatprep.subr.bf16.mxu0 0
    %63 = vmatpush1.bf16.msra.mxu0 0
    %64 = vmatprep.subr.bf16.mxu0 0
    %65 = vmatpush1.bf16.msra.mxu0 0
    %66 = vmatprep.subr.bf16.mxu0 0
    %67 = vmatpush1.bf16.msra.mxu0 0
    %68 = vmatprep.subr.bf16.mxu0 0
    %69 = vmatpush1.bf16.msra.mxu0 0
    %70 = vmatprep.subr.bf16.mxu0 0
    %71 = vmatpush1.bf16.msra.mxu0 0
    %72 = vmatprep.subr.bf16.mxu0 0
    %73 = vmatpush1.bf16.msra.mxu0 0
    %74 = vmatprep.subr.bf16.mxu0 0
    %75 = vmatpush1.bf16.msra.mxu0 0
    %76 = vmatprep.subr.bf16.mxu0 0
    %77 = vmatpush1.bf16.msra.mxu0 0
    %78 = vmatprep.subr.bf16.mxu0 0
    %79 = vmatpush1.bf16.msra.mxu0 0
    %80 = vmatprep.subr.bf16.mxu0 0
    %81 = vmatpush1.bf16.msra.mxu0 0
    %82 = vmatprep.subr.bf16.mxu0 0
    %83 = vmatpush1.bf16.msra.mxu0 0
    %84 = vmatprep.subr.bf16.mxu0 0
    %85 = vmatpush1.bf16.msra.mxu0 0
    %86 = vmatprep.mubr.bf16.mxu0 0
    %87 = vmatmul.mubr.bf16.gmra.mrb[0].mxu0 %v45
    %v88 = vpop.f32.mrb[0].mxu0
    %v89 = vadd.f32 %v36, %v88
    %v90 = vpop.f32.mrb[0].mxu0
    %v91 = vpop.f32.mrb[0].mxu0
    %v92 = vadd.f32 %v36, %v91
    %v93 = vpop.f32.mrb[0].mxu0
    %94 = vdwg.mxu0
    %vm95 = vcmask 523264
    %96 = vst.msk [vmem:[#allocation2] sm:$0xff] %vm95, %v89
    %97 = vst.msk [vmem:[#allocation2 + $0x8] sm:$0xff] %vm95, %v92
    %v98 = vld [vmem:[%s2] sm:$0xf]
    %v99 = vld [vmem:[%s2 + $0x4] sm:$0xf]
    %v100 = vld [vmem:[%s2 + $0x8] sm:$0xf]
    %v101 = vld [vmem:[%s2 + $0xc] sm:$0xf]
    %v102 = vld [vmem:[%s2 + $0x10] sm:$0xf]
    %v103 = vld [vmem:[%s2 + $0x14] sm:$0xf]
    %v104 = vld [vmem:[%s2 + $0x18] sm:$0xf]
    %v105 = vld [vmem:[%s2 + $0x1c] sm:$0xf]
    %v106 = vld [vmem:[#allocation2] sm:$0x1]
    %v107 = vld [vmem:[#allocation2 + $0x8] sm:$0x1]
    %v108 = vtanh.pop %v106
    %v109 = vtanh.pop %v107
    %v110 = vpack.c.bf16 %v108, %v108
    %v111 = vpack.c.bf16 %v109, %v109
    %v112 = vld [vmem:[#allocation2 + $0x1] sm:$0x1]
    %v113 = vld [vmem:[#allocation2 + $0x9] sm:$0x1]
    %v116 = vunpack.c.l.b16 %v110
    %v117 = vunpack.c.l.b16 %v111
    %v118 = vrot.slane %v117, 7
    %vm119 = vcmask 1041409
    %v120 = vsel %vm119, %v118, %v116
    %v121 = vpack.c.b16 %v120, %v120
    %v130 = vunpack.c.l.b16 %v98
    %v131 = vunpack.c.l.b16 %v99
    %v132 = vunpack.c.l.b16 %v100
    %v133 = vunpack.c.l.b16 %v101
    %v134 = vunpack.c.l.b16 %v102
    %v135 = vunpack.c.l.b16 %v103
    %v136 = vunpack.c.l.b16 %v104
    %v137 = vunpack.c.l.b16 %v105
    %v138 = vpack.c.b16 %v131, %v130
    %v139 = vpack.c.b16 %v133, %v132
    %v140 = vpack.c.b16 %v135, %v134
    %v141 = vpack.c.b16 %v137, %v136
    %v147 = vsel %vm95, %v121, 0
    %149 = vmatprep.subr.bf16.mxu0 0
    %150 = vmatpush1.bf16.msra.mxu0 %v138
    %151 = vmatprep.subr.bf16.mxu0 0
    %152 = vmatpush1.bf16.msra.mxu0 %v139
    %153 = vmatprep.subr.bf16.mxu0 0
    %154 = vmatpush1.bf16.msra.mxu0 %v140
    %155 = vmatprep.subr.bf16.mxu0 0
    %156 = vmatpush1.bf16.msra.mxu0 %v141
    %157 = vmatprep.subr.bf16.mxu0 0
    %158 = vmatpush1.bf16.msra.mxu0 0
    %159 = vmatprep.subr.bf16.mxu0 0
    %160 = vmatpush1.bf16.msra.mxu0 0
    %161 = vmatprep.subr.bf16.mxu0 0
    %162 = vmatpush1.bf16.msra.mxu0 0
    %163 = vmatprep.subr.bf16.mxu0 0
    %164 = vmatpush1.bf16.msra.mxu0 0
    %165 = vmatprep.subr.bf16.mxu0 0
    %166 = vmatpush1.bf16.msra.mxu0 0
    %167 = vmatprep.subr.bf16.mxu0 0
    %168 = vmatpush1.bf16.msra.mxu0 0
    %169 = vmatprep.subr.bf16.mxu0 0
    %170 = vmatpush1.bf16.msra.mxu0 0
    %171 = vmatprep.subr.bf16.mxu0 0
    %172 = vmatpush1.bf16.msra.mxu0 0
    %173 = vmatprep.subr.bf16.mxu0 0
    %174 = vmatpush1.bf16.msra.mxu0 0
    %175 = vmatprep.subr.bf16.mxu0 0
    %176 = vmatpush1.bf16.msra.mxu0 0
    %177 = vmatprep.subr.bf16.mxu0 0
    %178 = vmatpush1.bf16.msra.mxu0 0
    %179 = vmatprep.subr.bf16.mxu0 0
    %180 = vmatpush1.bf16.msra.mxu0 0
    %181 = vmatprep.mubr.bf16.mxu0 0
    %182 = vmatmul.mubr.bf16.gmra.mrb[0].mxu0 %v147
    %v183 = vpop.f32.mrb[0].mxu0
    %v184 = vadd.f32 0.0, %v183
    %v185 = vpop.f32.mrb[0].mxu0
    %v186 = vpop.f32.mrb[0].mxu0
    %v187 = vpop.f32.mrb[0].mxu0
    %188 = vdwg.mxu0
    %v190 = vrot.slane %v184, 1
    %v193 = vadd.f32 %v112, %v184
    %v194 = vadd.f32 %v113, %v190
    %v195 = vtanh.pop %v193
    %v196 = vtanh.pop %v194
    %v197 = vpack.c.bf16 %v195, %v195
    %v198 = vpack.c.bf16 %v196, %v196
    %v199 = vld [vmem:[#allocation2 + $0x2] sm:$0x1]
    %v200 = vld [vmem:[#allocation2 + $0xa] sm:$0x1]
    %v203 = vunpack.c.l.b16 %v197
    %v204 = vunpack.c.l.b16 %v198
    %v205 = vrot.slane %v204, 7
    %v206 = vsel %vm119, %v205, %v203
    %v207 = vpack.c.b16 %v206, %v206
    %v209 = vsel %vm95, %v207, 0
    %211 = vmatprep.subr.bf16.mxu0 0
    %212 = vmatpush1.bf16.msra.mxu0 %v138
    %213 = vmatprep.subr.bf16.mxu0 0
    %214 = vmatpush1.bf16.msra.mxu0 %v139
    %215 = vmatprep.subr.bf16.mxu0 0
    %216 = vmatpush1.bf16.msra.mxu0 %v140
    %217 = vmatprep.subr.bf16.mxu0 0
    %218 = vmatpush1.bf16.msra.mxu0 %v141
    %219 = vmatprep.subr.bf16.mxu0 0
    %220 = vmatpush1.bf16.msra.mxu0 0
    %221 = vmatprep.subr.bf16.mxu0 0
    %222 = vmatpush1.bf16.msra.mxu0 0
    %223 = vmatprep.subr.bf16.mxu0 0
    %224 = vmatpush1.bf16.msra.mxu0 0
    %225 = vmatprep.subr.bf16.mxu0 0
    %226 = vmatpush1.bf16.msra.mxu0 0
    %227 = vmatprep.subr.bf16.mxu0 0
    %228 = vmatpush1.bf16.msra.mxu0 0
    %229 = vmatprep.subr.bf16.mxu0 0
    %230 = vmatpush1.bf16.msra.mxu0 0
    %231 = vmatprep.subr.bf16.mxu0 0
    %232 = vmatpush1.bf16.msra.mxu0 0
    %233 = vmatprep.subr.bf16.mxu0 0
    %234 = vmatpush1.bf16.msra.mxu0 0
    %235 = vmatprep.subr.bf16.mxu0 0
    %236 = vmatpush1.bf16.msra.mxu0 0
    %237 = vmatprep.subr.bf16.mxu0 0
    %238 = vmatpush1.bf16.msra.mxu0 0
    %239 = vmatprep.subr.bf16.mxu0 0
    %240 = vmatpush1.bf16.msra.mxu0 0
    %241 = vmatprep.subr.bf16.mxu0 0
    %242 = vmatpush1.bf16.msra.mxu0 0
    %243 = vmatprep.mubr.bf16.mxu0 0
    %244 = vmatmul.mubr.bf16.gmra.mrb[0].mxu0 %v209
    %v245 = vpop.f32.mrb[0].mxu0
    %v246 = vadd.f32 0.0, %v245
    %v247 = vpop.f32.mrb[0].mxu0
    %v248 = vpop.f32.mrb[0].mxu0
    %v249 = vpop.f32.mrb[0].mxu0
    %250 = vdwg.mxu0
    %v252 = vrot.slane %v246, 1
    %v255 = vadd.f32 %v199, %v246
    %v256 = vadd.f32 %v200, %v252
    %v257 = vtanh.pop %v255
    %v258 = vtanh.pop %v256
    %v259 = vpack.c.bf16 %v257, %v257
    %v260 = vpack.c.bf16 %v258, %v258
    %v261 = vld [vmem:[#allocation2 + $0x3] sm:$0x1]
    %v262 = vld [vmem:[#allocation2 + $0xb] sm:$0x1]
    %v265 = vunpack.c.l.b16 %v259
    %v266 = vunpack.c.l.b16 %v260
    %v267 = vrot.slane %v266, 7
    %v268 = vsel %vm119, %v267, %v265
    %v269 = vpack.c.b16 %v268, %v268
    %v271 = vsel %vm95, %v269, 0
    %273 = vmatprep.subr.bf16.mxu0 0
    %274 = vmatpush1.bf16.msra.mxu0 %v138
    %275 = vmatprep.subr.bf16.mxu0 0
    %276 = vmatpush1.bf16.msra.mxu0 %v139
    %277 = vmatprep.subr.bf16.mxu0 0
    %278 = vmatpush1.bf16.msra.mxu0 %v140
    %279 = vmatprep.subr.bf16.mxu0 0
    %280 = vmatpush1.bf16.msra.mxu0 %v141
    %281 = vmatprep.subr.bf16.mxu0 0
    %282 = vmatpush1.bf16.msra.mxu0 0
    %283 = vmatprep.subr.bf16.mxu0 0
    %284 = vmatpush1.bf16.msra.mxu0 0
    %285 = vmatprep.subr.bf16.mxu0 0
    %286 = vmatpush1.bf16.msra.mxu0 0
    %287 = vmatprep.subr.bf16.mxu0 0
    %288 = vmatpush1.bf16.msra.mxu0 0
    %289 = vmatprep.subr.bf16.mxu0 0
    %290 = vmatpush1.bf16.msra.mxu0 0
    %291 = vmatprep.subr.bf16.mxu0 0
    %292 = vmatpush1.bf16.msra.mxu0 0
    %293 = vmatprep.subr.bf16.mxu0 0
    %294 = vmatpush1.bf16.msra.mxu0 0
    %295 = vmatprep.subr.bf16.mxu0 0
    %296 = vmatpush1.bf16.msra.mxu0 0
    %297 = vmatprep.subr.bf16.mxu0 0
    %298 = vmatpush1.bf16.msra.mxu0 0
    %299 = vmatprep.subr.bf16.mxu0 0
    %300 = vmatpush1.bf16.msra.mxu0 0
    %301 = vmatprep.subr.bf16.mxu0 0
    %302 = vmatpush1.bf16.msra.mxu0 0
    %303 = vmatprep.subr.bf16.mxu0 0
    %304 = vmatpush1.bf16.msra.mxu0 0
    %305 = vmatprep.mubr.bf16.mxu0 0
    %306 = vmatmul.mubr.bf16.gmra.mrb[0].mxu0 %v271
    %v307 = vpop.f32.mrb[0].mxu0
    %v308 = vadd.f32 0.0, %v307
    %v309 = vpop.f32.mrb[0].mxu0
    %v310 = vpop.f32.mrb[0].mxu0
    %v311 = vpop.f32.mrb[0].mxu0
    %312 = vdwg.mxu0
    %v314 = vrot.slane %v308, 1
    %v317 = vadd.f32 %v261, %v308
    %v318 = vadd.f32 %v262, %v314
    %v319 = vtanh.pop %v317
    %v320 = vtanh.pop %v318
    %v321 = vpack.c.bf16 %v319, %v319
    %v322 = vpack.c.bf16 %v320, %v320
    %v323 = vld [vmem:[#allocation2 + $0x4] sm:$0x1]
    %v324 = vld [vmem:[#allocation2 + $0xc] sm:$0x1]
    %v327 = vunpack.c.l.b16 %v321
    %v328 = vunpack.c.l.b16 %v322
    %v329 = vrot.slane %v328, 7
    %v330 = vsel %vm119, %v329, %v327
    %v331 = vpack.c.b16 %v330, %v330
    %v333 = vsel %vm95, %v331, 0
    %335 = vmatprep.subr.bf16.mxu0 0
    %336 = vmatpush1.bf16.msra.mxu0 %v138
    %337 = vmatprep.subr.bf16.mxu0 0
    %338 = vmatpush1.bf16.msra.mxu0 %v139
    %339 = vmatprep.subr.bf16.mxu0 0
    %340 = vmatpush1.bf16.msra.mxu0 %v140
    %341 = vmatprep.subr.bf16.mxu0 0
    %342 = vmatpush1.bf16.msra.mxu0 %v141
    %343 = vmatprep.subr.bf16.mxu0 0
    %344 = vmatpush1.bf16.msra.mxu0 0
    %345 = vmatprep.subr.bf16.mxu0 0
    %346 = vmatpush1.bf16.msra.mxu0 0
    %347 = vmatprep.subr.bf16.mxu0 0
    %348 = vmatpush1.bf16.msra.mxu0 0
    %349 = vmatprep.subr.bf16.mxu0 0
    %350 = vmatpush1.bf16.msra.mxu0 0
    %351 = vmatprep.subr.bf16.mxu0 0
    %352 = vmatpush1.bf16.msra.mxu0 0
    %353 = vmatprep.subr.bf16.mxu0 0
    %354 = vmatpush1.bf16.msra.mxu0 0
    %355 = vmatprep.subr.bf16.mxu0 0
    %356 = vmatpush1.bf16.msra.mxu0 0
    %357 = vmatprep.subr.bf16.mxu0 0
    %358 = vmatpush1.bf16.msra.mxu0 0
    %359 = vmatprep.subr.bf16.mxu0 0
    %360 = vmatpush1.bf16.msra.mxu0 0
    %361 = vmatprep.subr.bf16.mxu0 0
    %362 = vmatpush1.bf16.msra.mxu0 0
    %363 = vmatprep.subr.bf16.mxu0 0
    %364 = vmatpush1.bf16.msra.mxu0 0
    %365 = vmatprep.subr.bf16.mxu0 0
    %366 = vmatpush1.bf16.msra.mxu0 0
    %367 = vmatprep.mubr.bf16.mxu0 0
    %368 = vmatmul.mubr.bf16.gmra.mrb[0].mxu0 %v333
    %v369 = vpop.f32.mrb[0].mxu0
    %v370 = vadd.f32 0.0, %v369
    %v371 = vpop.f32.mrb[0].mxu0
    %v372 = vpop.f32.mrb[0].mxu0
    %v373 = vpop.f32.mrb[0].mxu0
    %374 = vdwg.mxu0
    %v376 = vrot.slane %v370, 1
    %v379 = vadd.f32 %v323, %v370
    %v380 = vadd.f32 %v324, %v376
    %v381 = vtanh.pop %v379
    %v382 = vtanh.pop %v380
    %v383 = vpack.c.bf16 %v381, %v381
    %v384 = vpack.c.bf16 %v382, %v382
    %v385 = vld [vmem:[#allocation2 + $0x5] sm:$0x1]
    %v386 = vld [vmem:[#allocation2 + $0xd] sm:$0x1]
    %v389 = vunpack.c.l.b16 %v383
    %v390 = vunpack.c.l.b16 %v384
    %v391 = vrot.slane %v390, 7
    %v392 = vsel %vm119, %v391, %v389
    %v393 = vpack.c.b16 %v392, %v392
    %v395 = vsel %vm95, %v393, 0
    %397 = vmatprep.subr.bf16.mxu0 0
    %398 = vmatpush1.bf16.msra.mxu0 %v138
    %399 = vmatprep.subr.bf16.mxu0 0
    %400 = vmatpush1.bf16.msra.mxu0 %v139
    %401 = vmatprep.subr.bf16.mxu0 0
    %402 = vmatpush1.bf16.msra.mxu0 %v140
    %403 = vmatprep.subr.bf16.mxu0 0
    %404 = vmatpush1.bf16.msra.mxu0 %v141
    %405 = vmatprep.subr.bf16.mxu0 0
    %406 = vmatpush1.bf16.msra.mxu0 0
    %407 = vmatprep.subr.bf16.mxu0 0
    %408 = vmatpush1.bf16.msra.mxu0 0
    %409 = vmatprep.subr.bf16.mxu0 0
    %410 = vmatpush1.bf16.msra.mxu0 0
    %411 = vmatprep.subr.bf16.mxu0 0
    %412 = vmatpush1.bf16.msra.mxu0 0
    %413 = vmatprep.subr.bf16.mxu0 0
    %414 = vmatpush1.bf16.msra.mxu0 0
    %415 = vmatprep.subr.bf16.mxu0 0
    %416 = vmatpush1.bf16.msra.mxu0 0
    %417 = vmatprep.subr.bf16.mxu0 0
    %418 = vmatpush1.bf16.msra.mxu0 0
    %419 = vmatprep.subr.bf16.mxu0 0
    %420 = vmatpush1.bf16.msra.mxu0 0
    %421 = vmatprep.subr.bf16.mxu0 0
    %422 = vmatpush1.bf16.msra.mxu0 0
    %423 = vmatprep.subr.bf16.mxu0 0
    %424 = vmatpush1.bf16.msra.mxu0 0
    %425 = vmatprep.subr.bf16.mxu0 0
    %426 = vmatpush1.bf16.msra.mxu0 0
    %427 = vmatprep.subr.bf16.mxu0 0
    %428 = vmatpush1.bf16.msra.mxu0 0
    %429 = vmatprep.mubr.bf16.mxu0 0
    %430 = vmatmul.mubr.bf16.gmra.mrb[0].mxu0 %v395
    %v431 = vpop.f32.mrb[0].mxu0
    %v432 = vadd.f32 0.0, %v431
    %v433 = vpop.f32.mrb[0].mxu0
    %v434 = vpop.f32.mrb[0].mxu0
    %v435 = vpop.f32.mrb[0].mxu0
    %436 = vdwg.mxu0
    %v438 = vrot.slane %v432, 1
    %v441 = vadd.f32 %v385, %v432
    %v442 = vadd.f32 %v386, %v438
    %v443 = vtanh.pop %v441
    %v444 = vtanh.pop %v442
    %v445 = vpack.c.bf16 %v443, %v443
    %v446 = vpack.c.bf16 %v444, %v444
    %v447 = vld [vmem:[#allocation2 + $0x6] sm:$0x1]
    %v448 = vld [vmem:[#allocation2 + $0xe] sm:$0x1]
    %v451 = vunpack.c.l.b16 %v445
    %v452 = vunpack.c.l.b16 %v446
    %v453 = vrot.slane %v452, 7
    %v454 = vsel %vm119, %v453, %v451
    %v455 = vpack.c.b16 %v454, %v454
    %v457 = vsel %vm95, %v455, 0
    %459 = vmatprep.subr.bf16.mxu0 0
    %460 = vmatpush1.bf16.msra.mxu0 %v138
    %461 = vmatprep.subr.bf16.mxu0 0
    %462 = vmatpush1.bf16.msra.mxu0 %v139
    %463 = vmatprep.subr.bf16.mxu0 0
    %464 = vmatpush1.bf16.msra.mxu0 %v140
    %465 = vmatprep.subr.bf16.mxu0 0
    %466 = vmatpush1.bf16.msra.mxu0 %v141
    %467 = vmatprep.subr.bf16.mxu0 0
    %468 = vmatpush1.bf16.msra.mxu0 0
    %469 = vmatprep.subr.bf16.mxu0 0
    %470 = vmatpush1.bf16.msra.mxu0 0
    %471 = vmatprep.subr.bf16.mxu0 0
    %472 = vmatpush1.bf16.msra.mxu0 0
    %473 = vmatprep.subr.bf16.mxu0 0
    %474 = vmatpush1.bf16.msra.mxu0 0
    %475 = vmatprep.subr.bf16.mxu0 0
    %476 = vmatpush1.bf16.msra.mxu0 0
    %477 = vmatprep.subr.bf16.mxu0 0
    %478 = vmatpush1.bf16.msra.mxu0 0
    %479 = vmatprep.subr.bf16.mxu0 0
    %480 = vmatpush1.bf16.msra.mxu0 0
    %481 = vmatprep.subr.bf16.mxu0 0
    %482 = vmatpush1.bf16.msra.mxu0 0
    %483 = vmatprep.subr.bf16.mxu0 0
    %484 = vmatpush1.bf16.msra.mxu0 0
    %485 = vmatprep.subr.bf16.mxu0 0
    %486 = vmatpush1.bf16.msra.mxu0 0
    %487 = vmatprep.subr.bf16.mxu0 0
    %488 = vmatpush1.bf16.msra.mxu0 0
    %489 = vmatprep.subr.bf16.mxu0 0
    %490 = vmatpush1.bf16.msra.mxu0 0
    %491 = vmatprep.mubr.bf16.mxu0 0
    %492 = vmatmul.mubr.bf16.gmra.mrb[0].mxu0 %v457
    %v493 = vpop.f32.mrb[0].mxu0
    %v494 = vadd.f32 0.0, %v493
    %v495 = vpop.f32.mrb[0].mxu0
    %v496 = vpop.f32.mrb[0].mxu0
    %v497 = vpop.f32.mrb[0].mxu0
    %498 = vdwg.mxu0
    %v500 = vrot.slane %v494, 1
    %v503 = vadd.f32 %v447, %v494
    %v504 = vadd.f32 %v448, %v500
    %v505 = vtanh.pop %v503
    %v506 = vtanh.pop %v504
    %v507 = vpack.c.bf16 %v505, %v505
    %v508 = vpack.c.bf16 %v506, %v506
    %v509 = vld [vmem:[#allocation2 + $0x7] sm:$0x1]
    %v510 = vld [vmem:[#allocation2 + $0xf] sm:$0x1]
    %v513 = vunpack.c.l.b16 %v507
    %v514 = vunpack.c.l.b16 %v508
    %v515 = vrot.slane %v514, 7
    %v516 = vsel %vm119, %v515, %v513
    %v517 = vpack.c.b16 %v516, %v516
    %v519 = vsel %vm95, %v517, 0
    %521 = vmatprep.subr.bf16.mxu0 0
    %522 = vmatpush1.bf16.msra.mxu0 %v138
    %523 = vmatprep.subr.bf16.mxu0 0
    %524 = vmatpush1.bf16.msra.mxu0 %v139
    %525 = vmatprep.subr.bf16.mxu0 0
    %526 = vmatpush1.bf16.msra.mxu0 %v140
    %527 = vmatprep.subr.bf16.mxu0 0
    %528 = vmatpush1.bf16.msra.mxu0 %v141
    %529 = vmatprep.subr.bf16.mxu0 0
    %530 = vmatpush1.bf16.msra.mxu0 0
    %531 = vmatprep.subr.bf16.mxu0 0
    %532 = vmatpush1.bf16.msra.mxu0 0
    %533 = vmatprep.subr.bf16.mxu0 0
    %534 = vmatpush1.bf16.msra.mxu0 0
    %535 = vmatprep.subr.bf16.mxu0 0
    %536 = vmatpush1.bf16.msra.mxu0 0
    %537 = vmatprep.subr.bf16.mxu0 0
    %538 = vmatpush1.bf16.msra.mxu0 0
    %539 = vmatprep.subr.bf16.mxu0 0
    %540 = vmatpush1.bf16.msra.mxu0 0
    %541 = vmatprep.subr.bf16.mxu0 0
    %542 = vmatpush1.bf16.msra.mxu0 0
    %543 = vmatprep.subr.bf16.mxu0 0
    %544 = vmatpush1.bf16.msra.mxu0 0
    %545 = vmatprep.subr.bf16.mxu0 0
    %546 = vmatpush1.bf16.msra.mxu0 0
    %547 = vmatprep.subr.bf16.mxu0 0
    %548 = vmatpush1.bf16.msra.mxu0 0
    %549 = vmatprep.subr.bf16.mxu0 0
    %550 = vmatpush1.bf16.msra.mxu0 0
    %551 = vmatprep.subr.bf16.mxu0 0
    %552 = vmatpush1.bf16.msra.mxu0 0
    %553 = vmatprep.mubr.bf16.mxu0 0
    %554 = vmatmul.mubr.bf16.gmra.mrb[0].mxu0 %v519
    %v555 = vpop.f32.mrb[0].mxu0
    %v556 = vadd.f32 0.0, %v555
    %v557 = vpop.f32.mrb[0].mxu0
    %v558 = vpop.f32.mrb[0].mxu0
    %v559 = vpop.f32.mrb[0].mxu0
    %560 = vdwg.mxu0
    %v562 = vrot.slane %v556, 1
    %v565 = vadd.f32 %v509, %v556
    %v566 = vadd.f32 %v510, %v562
    %v567 = vtanh.pop %v565
    %v568 = vtanh.pop %v566
    %v569 = vld [vmem:[%s4] sm:$0x1]
    %s570 = sld [smem:[#allocation3]]
    %v571 = vstv %s570
    %v574 = vrot.slane %v568, 7
    %v575 = vsel %vm119, %v574, %v567
    %v577 = vsel %vm95, %v569, 0
    %v579 = vsel %vm95, %v575, 0
    %581 = vmatprep.subr.mxu0 0.0
    %582 = vmatpush1.xpose.msra.mxu0 %v579
    %583 = vmatprep.subr.mxu0 0.0
    %584 = vmatpush1.xpose.msra.mxu0 0.0
    %585 = vmatprep.subr.mxu0 0.0
    %586 = vmatpush1.xpose.msra.mxu0 0.0
    %587 = vmatprep.subr.mxu0 0.0
    %588 = vmatpush1.xpose.msra.mxu0 0.0
    %589 = vmatprep.subr.mxu0 0.0
    %590 = vmatpush1.xpose.msra.mxu0 0.0
    %591 = vmatprep.subr.mxu0 0.0
    %592 = vmatpush1.xpose.msra.mxu0 0.0
    %593 = vmatprep.subr.mxu0 0.0
    %594 = vmatpush1.xpose.msra.mxu0 0.0
    %595 = vmatprep.subr.mxu0 0.0
    %596 = vmatpush1.xpose.msra.mxu0 0.0
    %597 = vmatprep.subr.mxu0 0.0
    %598 = vmatpush1.xpose.msra.mxu0 0.0
    %599 = vmatprep.subr.mxu0 0.0
    %600 = vmatpush1.xpose.msra.mxu0 0.0
    %601 = vmatprep.subr.mxu0 0.0
    %602 = vmatpush1.xpose.msra.mxu0 0.0
    %603 = vmatprep.subr.mxu0 0.0
    %604 = vmatpush1.xpose.msra.mxu0 0.0
    %605 = vmatprep.subr.mxu0 0.0
    %606 = vmatpush1.xpose.msra.mxu0 0.0
    %607 = vmatprep.subr.mxu0 0.0
    %608 = vmatpush1.xpose.msra.mxu0 0.0
    %609 = vmatprep.subr.mxu0 0.0
    %610 = vmatpush1.xpose.msra.mxu0 0.0
    %611 = vmatprep.subr.mxu0 0.0
    %612 = vmatpush1.xpose.msra.mxu0 0.0
    %613 = vmatprep.subr.mxu0 0.0
    %614 = vmatpush1.xpose.msra.mxu0 0.0
    %615 = vmatprep.subr.mxu0 0.0
    %616 = vmatpush1.xpose.msra.mxu0 0.0
    %617 = vmatprep.subr.mxu0 0.0
    %618 = vmatpush1.xpose.msra.mxu0 0.0
    %619 = vmatprep.subr.mxu0 0.0
    %620 = vmatpush1.xpose.msra.mxu0 0.0
    %621 = vmatprep.subr.mxu0 0.0
    %622 = vmatpush1.xpose.msra.mxu0 0.0
    %623 = vmatprep.subr.mxu0 0.0
    %624 = vmatpush1.xpose.msra.mxu0 0.0
    %625 = vmatprep.subr.mxu0 0.0
    %626 = vmatpush1.xpose.msra.mxu0 0.0
    %627 = vmatprep.subr.mxu0 0.0
    %628 = vmatpush1.xpose.msra.mxu0 0.0
    %629 = vmatprep.subr.mxu0 0.0
    %630 = vmatpush1.xpose.msra.mxu0 0.0
    %631 = vmatprep.subr.mxu0 0.0
    %632 = vmatpush1.xpose.msra.mxu0 0.0
    %633 = vmatprep.subr.mxu0 0.0
    %634 = vmatpush1.xpose.msra.mxu0 0.0
    %635 = vmatprep.subr.mxu0 0.0
    %636 = vmatpush1.xpose.msra.mxu0 0.0
    %637 = vmatprep.subr.mxu0 0.0
    %638 = vmatpush1.xpose.msra.mxu0 0.0
    %639 = vmatprep.subr.mxu0 0.0
    %640 = vmatpush1.xpose.msra.mxu0 0.0
    %641 = vmatprep.subr.mxu0 0.0
    %642 = vmatpush1.xpose.msra.mxu0 0.0
    %643 = vmatprep.subr.mxu0 0.0
    %644 = vmatpush1.xpose.msra.mxu0 0.0
    %645 = vmatprep.mubr.f32.mxu0 0.0
    %646 = vmatmul.mubr.f32.gmra.mrb[0].mxu0 %v577
    %v647 = vpop.f32.mrb[0].mxu0
    %v648 = vadd.f32 %v571, %v647
    %v649 = vpop.f32.mrb[0].mxu0
    %650 = vdwg.mxu0
    %vm651 = vcmask 8192
    %652 = vst.msk [vmem:[#allocation4] sm:$0x1] %vm651, %v648
    // Predicated region
    $region26: #{pred_model_forward.1} parent=1 // pred_check
      _
    $region27: #{pred_model_forward.1} parent=1 // pred_check_branch
      %654 = sbr.rel (0) target = $region29
    $region28: #{pred_model_forward.1} parent=1 // pred_region
      %s656 = ssub.s32 16, 16
      %657 = vsyncadd [#allocation5], %s656
      %s659 = sshll.u32 [#allocation4], 4
      %s660 = int_to_ptr.vmem [resolvable:$true] %s659
      %662 = dma.vmem_to_hbm [thread:$0]  %s660, 16, %s6, [#allocation5]
    $region29: #{pred_model_forward.1} parent=1 // pred_fallthru
      _
    // Predicated region
    $region30: #{pred_model_forward.1} parent=1 // pred_check
      _
    $region31: #{pred_model_forward.1} parent=1 // pred_check_branch
      %664 = sbr.rel (0) target = $region33
    $region32: #{pred_model_forward.1} parent=1 // pred_region
      %665 = dma.done [#allocation5], 16
    $region33: #{pred_model_forward.1} parent=1 // pred_fallthru
      _
    %666 = vsyncpa [#allocation5], 1

</llo_original>
